<compile_context>
chip_gen: v7x
topology: tpu7x:2x2x1
jax: 0.10.0
libtpu: 0.0.40
codegen_flags: <defaults>
</compile_context>

<pallas_src>
import jax
import jax.numpy as jnp
from jax.experimental import pallas as pl
from jax.experimental.pallas import tpu as pltpu

EPS = 1e-5


# ----------------------------- VMEM budgeting ------------------------------

def _vmem_capacity_bytes():
    """Generation-aware physical VMEM query with a conservative fallback."""
    try:
        info = pltpu.get_tpu_info()
        cap = getattr(info, "vmem_capacity_bytes", None)
        if cap:
            return int(cap)
    except Exception:
        pass
    return 64 << 20  # v7x per-TC physical VMEM (smallest of the three gens)


def _vmem_limit_bytes():
    # Leave headroom below physical VMEM: v7x 64 MiB -> 48 MiB, v5e/v6e 128 -> 96 MiB.
    cap = _vmem_capacity_bytes()
    return int(min(max((cap * 3) // 4, 32 << 20), 128 << 20))


def _per_block_budget(vmem_limit):
    # x-in + y-out, each double-buffered, plus in-kernel f32 intermediates.
    return max(512 * 1024, min(8 << 20, vmem_limit // 10))


def _round_down(v, m):
    return (v // m) * m


# --------------------------- full-N (single pass) ---------------------------

def _make_fulln_kernel(n_rows):
    inv_n = 1.0 / n_rows

    def kernel(x_ref, gb_ref, o_ref):
        x = x_ref[...].astype(jnp.float32)                  # (N, TD)
        gb = gb_ref[...].astype(jnp.float32)                # (2, TD) packed gamma/beta
        gamma = gb[0:1, :]
        beta = gb[1:2, :]
        mean = jnp.sum(x, axis=0, keepdims=True) * inv_n    # sublane reduce (XLU)
        centered = x - mean
        var = jnp.sum(centered * centered, axis=0, keepdims=True) * inv_n
        scale = jax.lax.rsqrt(var + EPS) * gamma            # EUP rsqrt
        o_ref[...] = (centered * scale + beta).astype(o_ref.dtype)

    return kernel


def _pick_tile_d(N, D, itemsize, per_block):
    """Lane-dense feature tile for the full-N path.

    Returns None when even an (N, 128) block exceeds the per-block budget;
    the caller then falls back to the two-phase (tiled-N) path."""
    lanes = per_block // max(N * itemsize, 1)
    if lanes < 128:
        return None
    if D % 128 != 0 and lanes >= D:
        # Full-extent-D block avoids masked partial-lane stores for odd D.
        return D
    tile = _round_down(min(lanes, D), 128)
    if tile >= D:
        if D >= 256:
            # Guarantee >=2 D tiles so both v7x TensorCores get work.
            return max(128, _round_down(D // 2, 128))
        return D
    return max(128, tile)


# --------------------------- two-phase (tiled N) ----------------------------

def _bn_two_phase(x, gamma, beta, per_block, vmem_limit):
    N, D = x.shape
    itemsize = jnp.dtype(x.dtype).itemsize

    tile_d = D if D <= 512 else 512
    rows = per_block // max(tile_d * itemsize, 1)
    tile_n = max(8, _round_down(rows, 8))
    if tile_n >= N:
        tile_n = N
    num_d = pl.cdiv(D, tile_d)
    num_n = pl.cdiv(N, tile_n)

    # ---- pass 1: per-feature sum / sum-of-squares accumulated over N tiles ----
    def stats_kernel(x_ref, sum_ref, sq_ref):
        ni = pl.program_id(1)

        @pl.when(ni == 0)
        def _():
            sum_ref[...] = jnp.zeros_like(sum_ref)
            sq_ref[...] = jnp.zeros_like(sq_ref)

        xb = x_ref[...].astype(jnp.float32)
        # Mask padded rows of a partial last N tile (padding contents are undefined).
        row = jax.lax.broadcasted_iota(jnp.int32, xb.shape, 0) + ni * tile_n
        xb = jnp.where(row < N, xb, 0.0)
        # TODO(synk): single-pass sum/sum-sq loses precision for badly centered
        # inputs; switch to a shifted/Welford accumulation if that ever matters.
        sum_ref[...] += jnp.sum(xb, axis=0, keepdims=True)
        sq_ref[...] += jnp.sum(xb * xb, axis=0, keepdims=True)

    s, sq = pl.pallas_call(
        stats_kernel,
        out_shape=(jax.ShapeDtypeStruct((1, D), jnp.float32),
                   jax.ShapeDtypeStruct((1, D), jnp.float32)),
        grid=(num_d, num_n),
        in_specs=[pl.BlockSpec((tile_n, tile_d), lambda j, i: (i, j))],
        out_specs=(pl.BlockSpec((1, tile_d), lambda j, i: (0, j)),
                   pl.BlockSpec((1, tile_d), lambda j, i: (0, j))),
        compiler_params=pltpu.CompilerParams(
            dimension_semantics=("parallel", "arbitrary"),
            vmem_limit_bytes=vmem_limit),
    )(x)

    # Tiny (1, D) per-feature math: fold into a single scale/shift (plain JAX).
    mean = s / N
    var = jnp.maximum(sq / N - mean * mean, 0.0)
    scale = gamma[None, :].astype(jnp.float32) * jax.lax.rsqrt(var + EPS)
    shift = beta[None, :].astype(jnp.float32) - mean * scale
    ss = jnp.concatenate([scale, shift], axis=0)            # (2, D)

    # ---- pass 2: y = x * scale + shift, fully tiled over N and D ----
    def apply_kernel(x_ref, ss_ref, o_ref):
        xb = x_ref[...].astype(jnp.float32)
        ssb = ss_ref[...]
        o_ref[...] = (xb * ssb[0:1, :] + ssb[1:2, :]).astype(o_ref.dtype)

    return pl.pallas_call(
        apply_kernel,
        out_shape=jax.ShapeDtypeStruct((N, D), x.dtype),
        grid=(num_n, num_d),
        in_specs=[
            pl.BlockSpec((tile_n, tile_d), lambda i, j: (i, j)),
            pl.BlockSpec((2, tile_d), lambda i, j: (0, j)),
        ],
        out_specs=pl.BlockSpec((tile_n, tile_d), lambda i, j: (i, j)),
        compiler_params=pltpu.CompilerParams(
            dimension_semantics=("parallel", "parallel"),
            vmem_limit_bytes=vmem_limit),
    )(x, ss)


# --------------------------------- wrapper ----------------------------------

def normalize_batchnorm1d(x, gamma, beta, *, block_budget_bytes=None):
    """x: (N, D); gamma, beta: (D,). Returns (N, D) batch-normalized output
    matching torch.nn.BatchNorm1d training-mode forward.

    `block_budget_bytes` overrides the per-block VMEM budget (testing knob)."""
    N, D = x.shape
    itemsize = jnp.dtype(x.dtype).itemsize
    vmem_limit = _vmem_limit_bytes()
    per_block = (block_budget_bytes if block_budget_bytes is not None
                 else _per_block_budget(vmem_limit))

    tile_d = _pick_tile_d(N, D, itemsize, per_block)
    if tile_d is None:
        # Full-N block no longer fits the budget -> two-phase scheme.
        return _bn_two_phase(x, gamma, beta, per_block, vmem_limit)

    gb = jnp.stack([gamma, beta], axis=0)                    # (2, D): one small DMA
    num_tiles = pl.cdiv(D, tile_d)

    return pl.pallas_call(
        _make_fulln_kernel(N),
        out_shape=jax.ShapeDtypeStruct((N, D), x.dtype),
        grid=(num_tiles,),
        in_specs=[
            pl.BlockSpec((N, tile_d), lambda j: (0, j)),
            pl.BlockSpec((2, tile_d), lambda j: (0, j)),
        ],
        out_specs=pl.BlockSpec((N, tile_d), lambda j: (0, j)),
        compiler_params=pltpu.CompilerParams(
            dimension_semantics=("parallel",),
            vmem_limit_bytes=vmem_limit),
    )(x, gb)


# -------------------------------- reference ---------------------------------

def _reference(x, gamma, beta):
    x32 = x.astype(jnp.float32)
    mean = jnp.mean(x32, axis=0, keepdims=True)
    var = jnp.mean((x32 - mean) ** 2, axis=0, keepdims=True)  # biased, BN training
    y = gamma[None, :] * (x32 - mean) / jnp.sqrt(var + EPS) + beta[None, :]
    return y.astype(x.dtype)


if __name__ == "__main__":
    key = jax.random.PRNGKey(0)

    cases = [
        ((64, 256), None),         # main path: >=2 lane-dense D tiles (v7x 2 TCs)
        ((8, 32), None),           # tiny-D full-extent-block path
        ((100, 256), 32 * 1024),   # forced small budget -> two-phase (tiled-N) path
    ]

    ok = True
    for (N, D), budget in cases:
        key, kx, kg, kb = jax.random.split(key, 4)
        x = jax.random.normal(kx, (N, D), dtype=jnp.float32) * 2.0 + 0.5
        gamma = 1.0 + 0.1 * jax.random.normal(kg, (D,), dtype=jnp.float32)
        beta = 0.1 * jax.random.normal(kb, (D,), dtype=jnp.float32)

        out = jax.block_until_ready(
            normalize_batchnorm1d(x, gamma, beta, block_budget_bytes=budget))
        ref = _reference(x, gamma, beta)
        ok = ok and bool(jnp.allclose(out, ref, atol=2e-4, rtol=2e-4))

    assert ok, "mismatch vs reference"
    print("KERNEL_OK")
</pallas_src>

<mosaic_0001>
module attributes {stable_mosaic.version = 11 : i64} {
  func.func @kernel(%arg0: i32, %arg1: memref<64x128xf32, #tpu.memory_space<vmem>>, %arg2: memref<2x128xf32, #tpu.memory_space<vmem>>, %arg3: memref<64x128xf32, #tpu.memory_space<vmem>>) attributes {dimension_semantics = [#tpu.dimension_semantics<parallel>], iteration_bounds = array<i64: 2>, scalar_prefetch = 0 : i64, scratch_operands = 0 : i64, tpu.core_type = #tpu.core_type<tc>, window_params = [{transform_indices = @transform_0, window_bounds = array<i64: 64, 128>}, {transform_indices = @transform_1, window_bounds = array<i64: 2, 128>}, {transform_indices = @transform_2, window_bounds = array<i64: 64, 128>}]} {
    %c0 = arith.constant 0 : index
    %c0_0 = arith.constant 0 : index
    %0 = vector.load %arg1[%c0, %c0_0] : memref<64x128xf32, #tpu.memory_space<vmem>>, vector<64x128xf32>
    %c0_1 = arith.constant 0 : index
    %c0_2 = arith.constant 0 : index
    %1 = vector.load %arg2[%c0_1, %c0_2] : memref<2x128xf32, #tpu.memory_space<vmem>>, vector<2x128xf32>
    %2 = vector.extract_strided_slice %1 {offsets = [0, 0], sizes = [1, 128], strides = [1, 1]} : vector<2x128xf32> to vector<1x128xf32>
    %3 = vector.extract_strided_slice %1 {offsets = [1, 0], sizes = [1, 128], strides = [1, 1]} : vector<2x128xf32> to vector<1x128xf32>
    %cst = arith.constant dense<0.000000e+00> : vector<128xf32>
    %4 = vector.multi_reduction <add>, %0, %cst [0] : vector<64x128xf32> to vector<128xf32>
    %5 = vector.shape_cast %4 : vector<128xf32> to vector<1x128xf32>
    %cst_3 = arith.constant 1.562500e-02 : f32
    %6 = vector.broadcast %cst_3 : f32 to vector<1x128xf32>
    %7 = arith.mulf %5, %6 : vector<1x128xf32>
    %8 = vector.broadcast %7 : vector<1x128xf32> to vector<64x128xf32>
    %9 = arith.subf %0, %8 : vector<64x128xf32>
    %10 = arith.mulf %9, %9 : vector<64x128xf32>
    %cst_4 = arith.constant dense<0.000000e+00> : vector<128xf32>
    %11 = vector.multi_reduction <add>, %10, %cst_4 [0] : vector<64x128xf32> to vector<128xf32>
    %12 = vector.shape_cast %11 : vector<128xf32> to vector<1x128xf32>
    %cst_5 = arith.constant 1.562500e-02 : f32
    %13 = vector.broadcast %cst_5 : f32 to vector<1x128xf32>
    %14 = arith.mulf %12, %13 : vector<1x128xf32>
    %cst_6 = arith.constant 9.99999974E-6 : f32
    %15 = vector.broadcast %cst_6 : f32 to vector<1x128xf32>
    %16 = arith.addf %14, %15 : vector<1x128xf32>
    %17 = math.rsqrt %16 : vector<1x128xf32>
    %18 = arith.mulf %17, %2 : vector<1x128xf32>
    %19 = vector.broadcast %18 : vector<1x128xf32> to vector<64x128xf32>
    %20 = arith.mulf %9, %19 : vector<64x128xf32>
    %21 = vector.broadcast %3 : vector<1x128xf32> to vector<64x128xf32>
    %22 = arith.addf %20, %21 : vector<64x128xf32>
    %c0_7 = arith.constant 0 : index
    %c0_8 = arith.constant 0 : index
    %23 = vector.load %arg3[%c0_7, %c0_8] : memref<64x128xf32, #tpu.memory_space<vmem>>, vector<64x128xf32>
    tpu.vector_store %arg3[%c0_7, %c0_8], %22 {strides = array<i32>} : memref<64x128xf32, #tpu.memory_space<vmem>>, vector<64x128xf32>,
    return
  }
  func.func @transform_0(%arg0: i32) -> (i32, i32) {
    %c0_i32 = arith.constant 0 : i32
    %c0_i32_0 = arith.constant 0 : i32
    return %c0_i32, %arg0 : i32, i32
  }
  func.func @transform_1(%arg0: i32) -> (i32, i32) {
    %c0_i32 = arith.constant 0 : i32
    %c0_i32_0 = arith.constant 0 : i32
    return %c0_i32, %arg0 : i32, i32
  }
  func.func @transform_2(%arg0: i32) -> (i32, i32) {
    %c0_i32 = arith.constant 0 : i32
    %c0_i32_0 = arith.constant 0 : i32
    return %c0_i32, %arg0 : i32, i32
  }
}

</mosaic_0001>

<llo_original>
// kernel: tpu_custom_call.1
$region0: #{tpu_custom_call.1}
  #allocation0 [shape = 'u32[]', space=smem, size = 0x4, offset = 0x4, fixed_abs, tag = 'smem constant byte address 0x4 - core index']
  #allocation1 [shape = 'u32[144,128]{1,0:T(1,128)}', space=vmem, size = 0x12000, scoped, tag = 'internal scratch']
  %s0 = inlined_call_operand.hbm [shape: f32[64,256], index: 0, kind: input, shape index: {}]
  %s1 = inlined_call_operand.hbm [shape: f32[2,256], index: 1, kind: input, shape index: {}]
  %s2 = inlined_call_operand.hbm [shape: f32[64,256], index: 2, kind: output, shape index: {}]
  %s3 = sld [smem:[#allocation0]]
  $region49: #{tpu_custom_call.1} parent=0
    _
  %s5 = ssub.s32 1, %s3
  %s6 = scalar_select 0, %s5, %s3
  $region1: #{tpu_custom_call.1} parent=0
    #allocation2 [shape = 'u8[65536]{0}', space=vmem, size = 0x10000, scoped, tag = 'input window, operand 0']
    #allocation3 [shape = 's32[2]{0}', space=sflag, size = 0x8, scoped, tag = 'scoped memory for tpu_custom_call.1']
    #allocation4 [shape = 's32[2]{0}', space=sflag, size = 0x8, scoped, tag = 'scoped memory for tpu_custom_call.1']
    #allocation5 [shape = 'u8[2048]{0}', space=vmem, size = 0x800, scoped, tag = 'input window, operand 1']
    #allocation6 [shape = 's32[2]{0}', space=sflag, size = 0x8, scoped, tag = 'scoped memory for tpu_custom_call.1']
    #allocation7 [shape = 'u8[65536]{0}', space=vmem, size = 0x10000, scoped, tag = 'output window, operand 0']
    %7 = vsyncpa [#allocation3], 0
    %s8 = scalar_lea.sflag [#allocation3], 1
    %9 = vsyncpa %s8, 0
    %10 = vsyncpa [#allocation6], 0
    %s11 = scalar_lea.sflag [#allocation6], 1
    %12 = vsyncpa %s11, 0
    %13 = vsyncpa [#allocation4], 0
    %s14 = scalar_lea.sflag [#allocation4], 1
    %15 = vsyncpa %s14, 0
    loop: start=0, step=1, limit=4
    $region2: #{tpu_custom_call.1} parent=1 // loop_pre_header
      _
    $region3: #{tpu_custom_call.1} parent=1 // loop_header
      %s17 = sphi 0, %s21
      %p18 = scmp.ge.s32.totalorder %s17, 4
      %s27 = sphi 0, %s29
      %s30 = sphi 0, %s27
      %s31 = sphi 0, %s30
      %s47 = sphi 0, %s31
      %s53 = sphi 0, %s55
      %s56 = sphi 0, %s53
      %s57 = sphi 0, %s56
      %s73 = sphi 0, %s57
      %s79 = sphi 0, %s81
      %s82 = sphi 0, %s79
      %s83 = sphi 0, %s82
      %s99 = sphi 0, %s83
    $region4: #{tpu_custom_call.1} parent=1 // loop_header_branch
      %20 = sbr.rel (%p18) target = $region8
    $region5: #{tpu_custom_call.1} parent=1 // loop_body
      %s22 = ssub.s32 %s17, 1
      %s23 = ssub.s32 %s17, 2
      %s24 = sadd.s32 %s17, 1
      %s25 = ssub.s32 %s17, %s24
      %p26 = scmp.eq.s32.totalorder %s25, 0
      %s28 = sadd.s32 %s27, 1
      %s29 = scalar_select %p26, %s27, %s28
      %p32 = pneg %p26
      %p33 = scmp.eq.s32.totalorder %s17, 1
      %p34 = por %p32, %p33
      %p35 = scmp.ne.s32.totalorder %s27, %s30
      %p36 = scmp.eq.s32.totalorder %s17, 0
      %p37 = por %p35, %p36
      %p38 = scmp.ne.s32.totalorder %s27, %s30
      %p39 = scmp.eq.s32.totalorder %s22, 1
      %p40 = por %p38, %p39
      %p41 = scmp.ne.s32.totalorder %s30, %s31
      %p42 = scmp.eq.s32.totalorder %s22, 0
      %p43 = por %p41, %p42
      %p44 = scmp.ne.s32.totalorder %s30, %s31
      %p45 = scmp.eq.s32.totalorder %s23, 1
      %p46 = por %p44, %p45
      %p48 = scmp.ne.s32.totalorder %s31, %s47
      %p49 = scmp.eq.s32.totalorder %s23, 0
      %p50 = por %p48, %p49
      %s51 = ssub.s32 %s17, %s24
      %p52 = scmp.eq.s32.totalorder %s51, 0
      %s54 = sadd.s32 %s53, 1
      %s55 = scalar_select %p52, %s53, %s54
      %p58 = pneg %p52
      %p59 = scmp.eq.s32.totalorder %s17, 1
      %p60 = por %p58, %p59
      %p61 = scmp.ne.s32.totalorder %s53, %s56
      %p62 = scmp.eq.s32.totalorder %s17, 0
      %p63 = por %p61, %p62
      %p64 = scmp.ne.s32.totalorder %s53, %s56
      %p65 = scmp.eq.s32.totalorder %s22, 1
      %p66 = por %p64, %p65
      %p67 = scmp.ne.s32.totalorder %s56, %s57
      %p68 = scmp.eq.s32.totalorder %s22, 0
      %p69 = por %p67, %p68
      %p70 = scmp.ne.s32.totalorder %s56, %s57
      %p71 = scmp.eq.s32.totalorder %s23, 1
      %p72 = por %p70, %p71
      %p74 = scmp.ne.s32.totalorder %s57, %s73
      %p75 = scmp.eq.s32.totalorder %s23, 0
      %p76 = por %p74, %p75
      %s77 = ssub.s32 %s17, %s24
      %p78 = scmp.eq.s32.totalorder %s77, 0
      %s80 = sadd.s32 %s79, 1
      %s81 = scalar_select %p78, %s79, %s80
      %p84 = pneg %p78
      %p85 = scmp.eq.s32.totalorder %s17, 1
      %p86 = por %p84, %p85
      %p87 = scmp.ne.s32.totalorder %s79, %s82
      %p88 = scmp.eq.s32.totalorder %s17, 0
      %p89 = por %p87, %p88
      %p90 = scmp.ne.s32.totalorder %s79, %s82
      %p91 = scmp.eq.s32.totalorder %s22, 1
      %p92 = por %p90, %p91
      %p93 = scmp.ne.s32.totalorder %s82, %s83
      %p94 = scmp.eq.s32.totalorder %s22, 0
      %p95 = por %p93, %p94
      %p96 = scmp.ne.s32.totalorder %s82, %s83
      %p97 = scmp.eq.s32.totalorder %s23, 1
      %p98 = por %p96, %p97
      %p100 = scmp.ne.s32.totalorder %s83, %s99
      %p101 = scmp.eq.s32.totalorder %s23, 0
      %p102 = por %p100, %p101
      %p103 = scmp.le.s32.totalorder 1, %s17
      %p104 = scmp.lt.s32.totalorder %s17, 3
      %p105 = pnand %p103, %p104
      %p106 = pneg %p105
      // Predicated region
      $region9: #{tpu_custom_call.1} parent=5 // pred_check
        _
      $region10: #{tpu_custom_call.1} parent=5 // pred_check_branch
        %108 = sbr.rel (%p105) target = $region12
      $region11: #{tpu_custom_call.1} parent=5 // pred_region
        %s109 = ssub.s32 %s17, 1
      $region12: #{tpu_custom_call.1} parent=5 // pred_fallthru
        _
      %p110 = scmp.lt.s32.totalorder %s17, 2
      // Predicated region
      $region13: #{tpu_custom_call.1} parent=5 // pred_check
        %p111 = pneg %p110
      $region14: #{tpu_custom_call.1} parent=5 // pred_check_branch
        %113 = sbr.rel (%p111) target = $region16
      $region15: #{tpu_custom_call.1} parent=5 // pred_region
        // Predicated region
        $region17: #{tpu_custom_call.1} parent=15 // pred_check
          %p114 = pneg %p37
        $region18: #{tpu_custom_call.1} parent=15 // pred_check_branch
          %116 = sbr.rel (%p114) target = $region20
        $region19: #{tpu_custom_call.1} parent=15 // pred_region
          %s117 = sand.u32 %s27, 1
          %s118 = scalar_lea.sflag [#allocation3], %s117
          %s119 = sand.u32 %s27, 1
          %s120 = smul.addr %s119, 64
          %s121 = scalar_lea.vmem [#allocation2], %s120
          %s123 = ssub.s32 1024, 1024
          %124 = vsyncadd %s118, %s123
          %s125 = smul.addr %s17, 128
          %s126 = scalar_lea.hbm %s0, %s125
          %s127 = sshll.u32 %s121, 4
          %s128 = int_to_ptr.vmem [resolvable:$true] %s127
          %133 = dma.hbm_to_vmem [thread:$0]  %s126, 1024, %s128, %s118, 256, 128, 8
        $region20: #{tpu_custom_call.1} parent=15 // pred_fallthru
          _
        // Predicated region
        $region21: #{tpu_custom_call.1} parent=15 // pred_check
          %p134 = pneg %p63
        $region22: #{tpu_custom_call.1} parent=15 // pred_check_branch
          %136 = sbr.rel (%p134) target = $region24
        $region23: #{tpu_custom_call.1} parent=15 // pred_region
          %s137 = sand.u32 %s53, 1
          %s138 = scalar_lea.sflag [#allocation6], %s137
          %s139 = sand.u32 %s53, 1
          %s140 = smul.addr %s139, 2
          %s141 = scalar_lea.vmem [#allocation5], %s140
          %s143 = ssub.s32 32, 32
          %144 = vsyncadd %s138, %s143
          %s145 = smul.addr %s17, 32
          %s146 = scalar_lea.hbm %s1, %s145
          %s148 = sshll.u32 %s141, 4
          %s149 = int_to_ptr.vmem [resolvable:$true] %s148
          %151 = dma.hbm_to_vmem [thread:$0]  %s146, 32, %s149, %s138
        $region24: #{tpu_custom_call.1} parent=15 // pred_fallthru
          _
      $region16: #{tpu_custom_call.1} parent=5 // pred_fallthru
        _
      %p152 = scmp.le.s32.totalorder 1, %s17
      %p153 = scmp.lt.s32.totalorder %s17, 3
      %p154 = pnand %p152, %p153
      %p155 = pneg %p154
      // Predicated region
      $region25: #{tpu_custom_call.1} parent=5 // pred_check
        _
      $region26: #{tpu_custom_call.1} parent=5 // pred_check_branch
        %157 = sbr.rel (%p154) target = $region28
      $region27: #{tpu_custom_call.1} parent=5 // pred_region
        %s158 = ssub.s32 %s17, 1
        %s159 = sand.u32 %s30, 1
        %s160 = scalar_lea.sflag [#allocation3], %s159
        %s161 = sand.u32 %s30, 1
        %s162 = smul.addr %s161, 64
        %s163 = scalar_lea.vmem [#allocation2], %s162
        // Predicated region
        $region29: #{tpu_custom_call.1} parent=27 // pred_check
          %p164 = pneg %p43
        $region30: #{tpu_custom_call.1} parent=27 // pred_check_branch
          %166 = sbr.rel (%p164) target = $region32
        $region31: #{tpu_custom_call.1} parent=27 // pred_region
          %167 = dma.done %s160, 1024
        $region32: #{tpu_custom_call.1} parent=27 // pred_fallthru
          _
        %s168 = sand.u32 %s56, 1
        %s169 = scalar_lea.sflag [#allocation6], %s168
        %s170 = sand.u32 %s56, 1
        %s171 = smul.addr %s170, 2
        %s172 = scalar_lea.vmem [#allocation5], %s171
        // Predicated region
        $region33: #{tpu_custom_call.1} parent=27 // pred_check
          %p173 = pneg %p69
        $region34: #{tpu_custom_call.1} parent=27 // pred_check_branch
          %175 = sbr.rel (%p173) target = $region36
        $region35: #{tpu_custom_call.1} parent=27 // pred_region
          %176 = dma.done %s169, 32
        $region36: #{tpu_custom_call.1} parent=27 // pred_fallthru
          _
        %s177 = sand.u32 %s30, 1
        %s178 = scalar_lea.sflag [#allocation3], %s177
        %s179 = sand.u32 %s30, 1
        %s180 = smul.addr %s179, 64
        %s181 = scalar_lea.vmem [#allocation2], %s180
        %p182 = pneg %p43
        %p183 = pneg %p40
        %s184 = sand.u32 %s56, 1
        %s185 = scalar_lea.sflag [#allocation6], %s184
        %s186 = sand.u32 %s56, 1
        %s187 = smul.addr %s186, 2
        %s188 = scalar_lea.vmem [#allocation5], %s187
        %p189 = pneg %p69
        %p190 = pneg %p66
        %p191 = pneg %p95
        %p192 = pneg %p92
        %s193 = sand.u32 %s82, 1
        %s194 = scalar_lea.sflag [#allocation4], %s193
        %s195 = sand.u32 %s82, 1
        %s196 = smul.addr %s195, 64
        %s197 = scalar_lea.vmem [#allocation7], %s196
        %v198 = vld [vmem:[%s163] sm:$0xff]
        %v199 = vld [vmem:[%s163 + $0x8] sm:$0xff]
        %v200 = vld [vmem:[%s163 + $0x10] sm:$0xff]
        %v201 = vld [vmem:[%s163 + $0x18] sm:$0xff]
        %v202 = vld [vmem:[%s163 + $0x20] sm:$0xff]
        %v203 = vld [vmem:[%s163 + $0x28] sm:$0xff]
        %v204 = vld [vmem:[%s163 + $0x30] sm:$0xff]
        %v205 = vld [vmem:[%s163 + $0x38] sm:$0xff]
        %v206 = vld [vmem:[%s172] sm:$0x3]
        %v207 = vadd.f32 %v198, %v199
        %v208 = vadd.f32 %v207, %v200
        %v209 = vadd.f32 %v208, %v201
        %v210 = vadd.f32 %v209, %v202
        %v211 = vadd.f32 %v210, %v203
        %v212 = vadd.f32 %v211, %v204
        %v213 = vadd.f32 %v212, %v205
        %v214 = vrot.slane %v213, 4
        %v215 = vadd.f32 %v213, %v214
        %v216 = vrot.slane %v215, 2
        %v217 = vadd.f32 %v215, %v216
        %v218 = vrot.slane %v217, 1
        %v219 = vadd.f32 %v217, %v218
        %v220 = vmul.f32 %v219, 0.015625
        %v221 = vsub.f32 %v198, %v220
        %v222 = vsub.f32 %v199, %v220
        %v223 = vsub.f32 %v200, %v220
        %v224 = vsub.f32 %v201, %v220
        %v225 = vsub.f32 %v202, %v220
        %v226 = vsub.f32 %v203, %v220
        %v227 = vsub.f32 %v204, %v220
        %v228 = vsub.f32 %v205, %v220
        %v229 = vmul.f32 %v221, %v221
        %v230 = vmul.f32 %v222, %v222
        %v231 = vmul.f32 %v223, %v223
        %v232 = vmul.f32 %v224, %v224
        %v233 = vmul.f32 %v225, %v225
        %v234 = vmul.f32 %v226, %v226
        %v235 = vmul.f32 %v227, %v227
        %v236 = vmul.f32 %v228, %v228
        %v237 = vadd.f32 %v229, %v230
        %v238 = vadd.f32 %v237, %v231
        %v239 = vadd.f32 %v238, %v232
        %v240 = vadd.f32 %v239, %v233
        %v241 = vadd.f32 %v240, %v234
        %v242 = vadd.f32 %v241, %v235
        %v243 = vadd.f32 %v242, %v236
        %v244 = vrot.slane %v243, 4
        %v245 = vadd.f32 %v243, %v244
        %v246 = vrot.slane %v245, 2
        %v247 = vadd.f32 %v245, %v246
        %v248 = vrot.slane %v247, 1
        %v249 = vadd.f32 %v247, %v248
        %v250 = vmul.f32 %v249, 0.015625
        %v251 = vadd.f32 %v250, 1e-05
        %v252 = vrsqrt.pop %v251
        %v253 = vmul.f32 %v252, %v206
        %v254 = vlaneseq
        %v255 = vshrl.u32 %v254, 7
        %v256 = vsub.s32 0, %v255
        %v257 = vrot.slane %v253, %v256
        %v258 = vmul.f32 %v221, %v257
        %v259 = vmul.f32 %v222, %v257
        %v260 = vmul.f32 %v223, %v257
        %v261 = vmul.f32 %v224, %v257
        %v262 = vmul.f32 %v225, %v257
        %v263 = vmul.f32 %v226, %v257
        %v264 = vmul.f32 %v227, %v257
        %v265 = vmul.f32 %v228, %v257
        %v266 = vlaneseq
        %v267 = vshrl.u32 %v266, 7
        %v268 = vsub.s32 1, %v267
        %v269 = vrot.slane %v206, %v268
        %v270 = vadd.f32 %v258, %v269
        %v271 = vadd.f32 %v259, %v269
        %v272 = vadd.f32 %v260, %v269
        %v273 = vadd.f32 %v261, %v269
        %v274 = vadd.f32 %v262, %v269
        %v275 = vadd.f32 %v263, %v269
        %v276 = vadd.f32 %v264, %v269
        %v277 = vadd.f32 %v265, %v269
        %278 = vst [vmem:[%s197] sm:$0xff] %v270
        %279 = vst [vmem:[%s197 + $0x8] sm:$0xff] %v271
        %280 = vst [vmem:[%s197 + $0x10] sm:$0xff] %v272
        %281 = vst [vmem:[%s197 + $0x18] sm:$0xff] %v273
        %282 = vst [vmem:[%s197 + $0x20] sm:$0xff] %v274
        %283 = vst [vmem:[%s197 + $0x28] sm:$0xff] %v275
        %284 = vst [vmem:[%s197 + $0x30] sm:$0xff] %v276
        %285 = vst [vmem:[%s197 + $0x38] sm:$0xff] %v277
        %s286 = sand.u32 %s82, 1
        %s287 = scalar_lea.sflag [#allocation4], %s286
        %s288 = sand.u32 %s82, 1
        %s289 = smul.addr %s288, 64
        %s290 = scalar_lea.vmem [#allocation7], %s289
        // Predicated region
        $region37: #{tpu_custom_call.1} parent=27 // pred_check
          %p291 = pneg %p92
        $region38: #{tpu_custom_call.1} parent=27 // pred_check_branch
          %293 = sbr.rel (%p291) target = $region40
        $region39: #{tpu_custom_call.1} parent=27 // pred_region
          %s295 = ssub.s32 1024, 1024
          %296 = vsyncadd %s287, %s295
          %s297 = smul.addr %s22, 128
          %s298 = scalar_lea.hbm %s2, %s297
          %s299 = sshll.u32 %s290, 4
          %s300 = int_to_ptr.vmem [resolvable:$true] %s299
          %305 = dma.vmem_to_hbm [thread:$0]  %s300, 1024, %s298, %s287, 128, 256, 8
        $region40: #{tpu_custom_call.1} parent=27 // pred_fallthru
          _
      $region28: #{tpu_custom_call.1} parent=5 // pred_fallthru
        _
      %p306 = scmp.le.s32.totalorder 2, %s17
      // Predicated region
      $region41: #{tpu_custom_call.1} parent=5 // pred_check
        %p307 = pneg %p306
      $region42: #{tpu_custom_call.1} parent=5 // pred_check_branch
        %309 = sbr.rel (%p307) target = $region44
      $region43: #{tpu_custom_call.1} parent=5 // pred_region
        %s310 = ssub.s32 %s17, 2
        // Predicated region
        $region45: #{tpu_custom_call.1} parent=43 // pred_check
          %p311 = pneg %p98
        $region46: #{tpu_custom_call.1} parent=43 // pred_check_branch
          %313 = sbr.rel (%p311) target = $region48
        $region47: #{tpu_custom_call.1} parent=43 // pred_region
          %s314 = sand.u32 %s83, 1
          %s315 = scalar_lea.sflag [#allocation4], %s314
          %s316 = sand.u32 %s83, 1
          %s317 = smul.addr %s316, 64
          %s318 = scalar_lea.vmem [#allocation7], %s317
          %319 = dma.done %s315, 1024
        $region48: #{tpu_custom_call.1} parent=43 // pred_fallthru
          _
      $region44: #{tpu_custom_call.1} parent=5 // pred_fallthru
        _
    $region6: #{tpu_custom_call.1} parent=1 // loop_footer
      %s21 = sadd.s32 1, %s17
    $region7: #{tpu_custom_call.1} parent=1 // loop_footer_branch
      %16 = sbr.rel target = $region3
    $region8: #{tpu_custom_call.1} parent=1 // loop_exit
      _
    %320 = vsyncpa [#allocation3], 1
    %s321 = scalar_lea.sflag [#allocation3], 1
    %322 = vsyncpa %s321, 1
    %323 = vsyncpa [#allocation6], 1
    %s324 = scalar_lea.sflag [#allocation6], 1
    %325 = vsyncpa %s324, 1
    %326 = vsyncpa [#allocation4], 1
    %s327 = scalar_lea.sflag [#allocation4], 1
    %328 = vsyncpa %s327, 1

</llo_original>
